<compile_context>
chip_gen: v7x
topology: tpu7x:2x2x1
jax: 0.10.0
libtpu: 0.0.40
codegen_flags: <defaults>
</compile_context>

<pallas_src>
import jax
import jax.numpy as jnp
from jax import lax
from jax.experimental import pallas as pl
from jax.experimental.pallas import tpu as pltpu


def _conv1x1_pad_bias_add_kernel(x_ref, w_ref, add_ref, o_ref):
    """Fused Conv2d(Cin->Cout, k=1, s=1, pad=1) + (bias + x3).

    x_ref  : (N, Cin, H, W)     VMEM  input, NCHW, unpadded
    w_ref  : (Cout*Cin,)        SMEM  flattened 1x1 conv weights
    add_ref: (1, Cout, 1, Wp)   VMEM  addend[o, w] = bias[o] + x3[w]
    o_ref  : (N, Cout, Hp, Wp)  VMEM  output, NCHW, Hp=H+2, Wp=W+2
    """
    N, Cin, H, W = x_ref.shape
    _, Cout, Hp, Wp = o_ref.shape

    # ---- Zero-pad the input spatially, once, in registers ----------------
    x_all = x_ref[...]                                        # (N, Cin, H, W)
    if W == 1:
        # Lane-pad via broadcast + a single masked select (avoids a minor-dim
        # concat); sublane-pad via one concat with zero rows.
        xw = jnp.broadcast_to(x_all, (N, Cin, H, Wp))         # lane-bcast 1->Wp
        zrow = jnp.zeros((N, Cin, 1, Wp), jnp.float32)
        xh = jnp.concatenate([zrow, xw, zrow], axis=2)        # (N, Cin, Hp, Wp)
        lane = lax.broadcasted_iota(jnp.int32, (N, Cin, Hp, Wp), 3)
        xp = jnp.where(lane == 1, xh, 0.0)
    else:
        zrow = jnp.zeros((N, Cin, 1, W), jnp.float32)
        zcol = jnp.zeros((N, Cin, Hp, 1), jnp.float32)
        xh = jnp.concatenate([zrow, x_all, zrow], axis=2)     # (N, Cin, Hp, W)
        xp = jnp.concatenate([zcol, xh, zcol], axis=3)        # (N, Cin, Hp, Wp)

    # Padded channel slabs stay live in vregs for all Cout FMAs.
    xs = [xp[:, c:c + 1, :, :] for c in range(Cin)]           # each (N,1,Hp,Wp)

    # ---- Pointwise projection: unrolled VPU FMAs over Cin (no MXU) -------
    chans = []
    for o in range(Cout):
        acc = w_ref[o * Cin] * xs[0]
        for c in range(1, Cin):
            acc = acc + w_ref[o * Cin + c] * xs[c]
        chans.append(acc)
    conv = jnp.concatenate(chans, axis=1)                     # (N, Cout, Hp, Wp)

    # ---- Single aligned full-slab store: conv + (bias + x3) --------------
    # Borders have conv == 0 (zero-padded input), so this is exact everywhere.
    o_ref[...] = conv + jnp.broadcast_to(add_ref[...], (N, Cout, Hp, Wp))


def model_forward(x, weight, bias, x3):
    """x: (N, Cin, H, W) f32; weight: (Cout, Cin, 1, 1); bias: (Cout,); x3: (3,) int."""
    N, Cin, H, W = x.shape
    Cout = weight.shape[0]
    Hp, Wp = H + 2, W + 2  # kernel=1, stride=1, padding=1

    # PyTorch broadcast rule for (N, Cout, Hp, Wp) + x3: trailing dims match or 1.
    assert x3.shape[0] in (Wp, 1), "broadcast of x3 against conv output fails"

    # Trivially cheap prep only: layout-preserving flatten of the 1x1 weights
    # and a 24-float (Cout, Wp) addend = bias + x3.
    w_flat = weight.reshape(Cout * Cin).astype(jnp.float32)
    addend = (bias.astype(jnp.float32)[:, None]
              + jnp.broadcast_to(x3.astype(jnp.float32), (Wp,))[None, :])
    addend = addend.reshape(1, Cout, 1, Wp)

    return pl.pallas_call(
        _conv1x1_pad_bias_add_kernel,
        out_shape=jax.ShapeDtypeStruct((N, Cout, Hp, Wp), jnp.float32),
        in_specs=[
            pl.BlockSpec(memory_space=pltpu.MemorySpace.VMEM),   # x (NCHW)
            pl.BlockSpec(memory_space=pltpu.MemorySpace.SMEM),   # flat weights
            pl.BlockSpec(memory_space=pltpu.MemorySpace.VMEM),   # bias + x3 addend
        ],
        out_specs=pl.BlockSpec(memory_space=pltpu.MemorySpace.VMEM),
    )(x.astype(jnp.float32), w_flat, addend)


def reference_forward(x, weight, bias, x3):
    # Pure-JAX reference for verification.
    xp = jnp.pad(x, ((0, 0), (0, 0), (1, 1), (1, 1)))
    wm = weight.reshape(weight.shape[0], weight.shape[1])  # (Cout, Cin)
    v1 = jnp.einsum("nchw,oc->nohw", xp, wm) + bias[None, :, None, None]
    return v1 + x3.astype(jnp.float32)  # broadcasts over last (W) dim


if __name__ == "__main__":
    key = jax.random.PRNGKey(0)
    kx, kw, kb = jax.random.split(key, 3)

    # Shapes consistent with the module: Cin=3, Cout=8, kernel 1x1, pad 1.
    # Input W=1 so the conv output W is 3 and `+ x3` broadcasts (as in PyTorch).
    N, Cin, H, W = 2, 3, 6, 1
    Cout = 8

    x1 = jax.random.normal(kx, (N, Cin, H, W), dtype=jnp.float32)
    weight = jax.random.normal(kw, (Cout, Cin, 1, 1), dtype=jnp.float32) * 0.1
    bias = jax.random.normal(kb, (Cout,), dtype=jnp.float32) * 0.1
    x3 = jnp.array([1, 2, 3], dtype=jnp.int32)

    out = jax.block_until_ready(model_forward(x1, weight, bias, x3))
    ref = reference_forward(x1, weight, bias, x3)

    assert out.shape == (N, Cout, H + 2, W + 2)
    assert jnp.allclose(out, ref, atol=1e-5, rtol=1e-5)

    print("KERNEL_OK")
</pallas_src>

<mosaic_0001>
module attributes {stable_mosaic.version = 11 : i64} {
  func.func @_conv1x1_pad_bias_add_kernel(%arg0: memref<2x3x6x1xf32, #tpu.memory_space<vmem>>, %arg1: memref<24xf32, #tpu.memory_space<smem>>, %arg2: memref<1x8x1x3xf32, #tpu.memory_space<vmem>>, %arg3: memref<2x8x8x3xf32, #tpu.memory_space<vmem>>) attributes {dimension_semantics = [], scalar_prefetch = 0 : i64, scratch_operands = 0 : i64, tpu.core_type = #tpu.core_type<tc>} {
    %c0 = arith.constant 0 : index
    %c0_0 = arith.constant 0 : index
    %c0_1 = arith.constant 0 : index
    %c0_2 = arith.constant 0 : index
    %0 = vector.load %arg0[%c0, %c0_0, %c0_1, %c0_2] : memref<2x3x6x1xf32, #tpu.memory_space<vmem>>, vector<2x3x6x1xf32>
    %1 = vector.shape_cast %0 : vector<2x3x6x1xf32> to vector<2x3x6x1xf32>
    %2 = vector.broadcast %1 : vector<2x3x6x1xf32> to vector<2x3x6x3xf32>
    %cst = arith.constant 0.000000e+00 : f32
    %3 = vector.broadcast %cst : f32 to vector<2x3x1x3xf32>
    %4 = tpu.concatenate %3, %2, %3 in 2 : vector<2x3x1x3xf32>, vector<2x3x6x3xf32>, vector<2x3x1x3xf32> -> vector<2x3x8x3xf32>
    %5 = tpu.iota {dimensions = array<i32: 3>} : vector<2x3x8x3xi32>
    %c1_i32 = arith.constant 1 : i32
    %6 = vector.broadcast %c1_i32 : i32 to vector<2x3x8x3xi32>
    %7 = arith.cmpi eq, %5, %6 : vector<2x3x8x3xi32>
    %cst_3 = arith.constant 0.000000e+00 : f32
    %8 = vector.broadcast %cst_3 : f32 to vector<2x3x8x3xf32>
    %9 = arith.select %7, %4, %8 : vector<2x3x8x3xi1>, vector<2x3x8x3xf32>
    %10 = vector.extract_strided_slice %9 {offsets = [0, 0, 0, 0], sizes = [2, 1, 8, 3], strides = [1, 1, 1, 1]} : vector<2x3x8x3xf32> to vector<2x1x8x3xf32>
    %11 = vector.extract_strided_slice %9 {offsets = [0, 1, 0, 0], sizes = [2, 1, 8, 3], strides = [1, 1, 1, 1]} : vector<2x3x8x3xf32> to vector<2x1x8x3xf32>
    %12 = vector.extract_strided_slice %9 {offsets = [0, 2, 0, 0], sizes = [2, 1, 8, 3], strides = [1, 1, 1, 1]} : vector<2x3x8x3xf32> to vector<2x1x8x3xf32>
    %c0_4 = arith.constant 0 : index
    %13 = memref.load %arg1[%c0_4] : memref<24xf32, #tpu.memory_space<smem>>
    %14 = vector.broadcast %13 : f32 to vector<2x1x8x3xf32>
    %15 = arith.mulf %14, %10 : vector<2x1x8x3xf32>
    %c1 = arith.constant 1 : index
    %16 = memref.load %arg1[%c1] : memref<24xf32, #tpu.memory_space<smem>>
    %17 = vector.broadcast %16 : f32 to vector<2x1x8x3xf32>
    %18 = arith.mulf %17, %11 : vector<2x1x8x3xf32>
    %19 = arith.addf %15, %18 : vector<2x1x8x3xf32>
    %c2 = arith.constant 2 : index
    %20 = memref.load %arg1[%c2] : memref<24xf32, #tpu.memory_space<smem>>
    %21 = vector.broadcast %20 : f32 to vector<2x1x8x3xf32>
    %22 = arith.mulf %21, %12 : vector<2x1x8x3xf32>
    %23 = arith.addf %19, %22 : vector<2x1x8x3xf32>
    %c3 = arith.constant 3 : index
    %24 = memref.load %arg1[%c3] : memref<24xf32, #tpu.memory_space<smem>>
    %25 = vector.broadcast %24 : f32 to vector<2x1x8x3xf32>
    %26 = arith.mulf %25, %10 : vector<2x1x8x3xf32>
    %c4 = arith.constant 4 : index
    %27 = memref.load %arg1[%c4] : memref<24xf32, #tpu.memory_space<smem>>
    %28 = vector.broadcast %27 : f32 to vector<2x1x8x3xf32>
    %29 = arith.mulf %28, %11 : vector<2x1x8x3xf32>
    %30 = arith.addf %26, %29 : vector<2x1x8x3xf32>
    %c5 = arith.constant 5 : index
    %31 = memref.load %arg1[%c5] : memref<24xf32, #tpu.memory_space<smem>>
    %32 = vector.broadcast %31 : f32 to vector<2x1x8x3xf32>
    %33 = arith.mulf %32, %12 : vector<2x1x8x3xf32>
    %34 = arith.addf %30, %33 : vector<2x1x8x3xf32>
    %c6 = arith.constant 6 : index
    %35 = memref.load %arg1[%c6] : memref<24xf32, #tpu.memory_space<smem>>
    %36 = vector.broadcast %35 : f32 to vector<2x1x8x3xf32>
    %37 = arith.mulf %36, %10 : vector<2x1x8x3xf32>
    %c7 = arith.constant 7 : index
    %38 = memref.load %arg1[%c7] : memref<24xf32, #tpu.memory_space<smem>>
    %39 = vector.broadcast %38 : f32 to vector<2x1x8x3xf32>
    %40 = arith.mulf %39, %11 : vector<2x1x8x3xf32>
    %41 = arith.addf %37, %40 : vector<2x1x8x3xf32>
    %c8 = arith.constant 8 : index
    %42 = memref.load %arg1[%c8] : memref<24xf32, #tpu.memory_space<smem>>
    %43 = vector.broadcast %42 : f32 to vector<2x1x8x3xf32>
    %44 = arith.mulf %43, %12 : vector<2x1x8x3xf32>
    %45 = arith.addf %41, %44 : vector<2x1x8x3xf32>
    %c9 = arith.constant 9 : index
    %46 = memref.load %arg1[%c9] : memref<24xf32, #tpu.memory_space<smem>>
    %47 = vector.broadcast %46 : f32 to vector<2x1x8x3xf32>
    %48 = arith.mulf %47, %10 : vector<2x1x8x3xf32>
    %c10 = arith.constant 10 : index
    %49 = memref.load %arg1[%c10] : memref<24xf32, #tpu.memory_space<smem>>
    %50 = vector.broadcast %49 : f32 to vector<2x1x8x3xf32>
    %51 = arith.mulf %50, %11 : vector<2x1x8x3xf32>
    %52 = arith.addf %48, %51 : vector<2x1x8x3xf32>
    %c11 = arith.constant 11 : index
    %53 = memref.load %arg1[%c11] : memref<24xf32, #tpu.memory_space<smem>>
    %54 = vector.broadcast %53 : f32 to vector<2x1x8x3xf32>
    %55 = arith.mulf %54, %12 : vector<2x1x8x3xf32>
    %56 = arith.addf %52, %55 : vector<2x1x8x3xf32>
    %c12 = arith.constant 12 : index
    %57 = memref.load %arg1[%c12] : memref<24xf32, #tpu.memory_space<smem>>
    %58 = vector.broadcast %57 : f32 to vector<2x1x8x3xf32>
    %59 = arith.mulf %58, %10 : vector<2x1x8x3xf32>
    %c13 = arith.constant 13 : index
    %60 = memref.load %arg1[%c13] : memref<24xf32, #tpu.memory_space<smem>>
    %61 = vector.broadcast %60 : f32 to vector<2x1x8x3xf32>
    %62 = arith.mulf %61, %11 : vector<2x1x8x3xf32>
    %63 = arith.addf %59, %62 : vector<2x1x8x3xf32>
    %c14 = arith.constant 14 : index
    %64 = memref.load %arg1[%c14] : memref<24xf32, #tpu.memory_space<smem>>
    %65 = vector.broadcast %64 : f32 to vector<2x1x8x3xf32>
    %66 = arith.mulf %65, %12 : vector<2x1x8x3xf32>
    %67 = arith.addf %63, %66 : vector<2x1x8x3xf32>
    %c15 = arith.constant 15 : index
    %68 = memref.load %arg1[%c15] : memref<24xf32, #tpu.memory_space<smem>>
    %69 = vector.broadcast %68 : f32 to vector<2x1x8x3xf32>
    %70 = arith.mulf %69, %10 : vector<2x1x8x3xf32>
    %c16 = arith.constant 16 : index
    %71 = memref.load %arg1[%c16] : memref<24xf32, #tpu.memory_space<smem>>
    %72 = vector.broadcast %71 : f32 to vector<2x1x8x3xf32>
    %73 = arith.mulf %72, %11 : vector<2x1x8x3xf32>
    %74 = arith.addf %70, %73 : vector<2x1x8x3xf32>
    %c17 = arith.constant 17 : index
    %75 = memref.load %arg1[%c17] : memref<24xf32, #tpu.memory_space<smem>>
    %76 = vector.broadcast %75 : f32 to vector<2x1x8x3xf32>
    %77 = arith.mulf %76, %12 : vector<2x1x8x3xf32>
    %78 = arith.addf %74, %77 : vector<2x1x8x3xf32>
    %c18 = arith.constant 18 : index
    %79 = memref.load %arg1[%c18] : memref<24xf32, #tpu.memory_space<smem>>
    %80 = vector.broadcast %79 : f32 to vector<2x1x8x3xf32>
    %81 = arith.mulf %80, %10 : vector<2x1x8x3xf32>
    %c19 = arith.constant 19 : index
    %82 = memref.load %arg1[%c19] : memref<24xf32, #tpu.memory_space<smem>>
    %83 = vector.broadcast %82 : f32 to vector<2x1x8x3xf32>
    %84 = arith.mulf %83, %11 : vector<2x1x8x3xf32>
    %85 = arith.addf %81, %84 : vector<2x1x8x3xf32>
    %c20 = arith.constant 20 : index
    %86 = memref.load %arg1[%c20] : memref<24xf32, #tpu.memory_space<smem>>
    %87 = vector.broadcast %86 : f32 to vector<2x1x8x3xf32>
    %88 = arith.mulf %87, %12 : vector<2x1x8x3xf32>
    %89 = arith.addf %85, %88 : vector<2x1x8x3xf32>
    %c21 = arith.constant 21 : index
    %90 = memref.load %arg1[%c21] : memref<24xf32, #tpu.memory_space<smem>>
    %91 = vector.broadcast %90 : f32 to vector<2x1x8x3xf32>
    %92 = arith.mulf %91, %10 : vector<2x1x8x3xf32>
    %c22 = arith.constant 22 : index
    %93 = memref.load %arg1[%c22] : memref<24xf32, #tpu.memory_space<smem>>
    %94 = vector.broadcast %93 : f32 to vector<2x1x8x3xf32>
    %95 = arith.mulf %94, %11 : vector<2x1x8x3xf32>
    %96 = arith.addf %92, %95 : vector<2x1x8x3xf32>
    %c23 = arith.constant 23 : index
    %97 = memref.load %arg1[%c23] : memref<24xf32, #tpu.memory_space<smem>>
    %98 = vector.broadcast %97 : f32 to vector<2x1x8x3xf32>
    %99 = arith.mulf %98, %12 : vector<2x1x8x3xf32>
    %100 = arith.addf %96, %99 : vector<2x1x8x3xf32>
    %101 = tpu.concatenate %23, %34, %45, %56, %67, %78, %89, %100 in 1 : vector<2x1x8x3xf32>, vector<2x1x8x3xf32>, vector<2x1x8x3xf32>, vector<2x1x8x3xf32>, vector<2x1x8x3xf32>, vector<2x1x8x3xf32>, vector<2x1x8x3xf32>, vector<2x1x8x3xf32> -> vector<2x8x8x3xf32>
    %c0_5 = arith.constant 0 : index
    %c0_6 = arith.constant 0 : index
    %c0_7 = arith.constant 0 : index
    %c0_8 = arith.constant 0 : index
    %102 = vector.load %arg2[%c0_5, %c0_6, %c0_7, %c0_8] : memref<1x8x1x3xf32, #tpu.memory_space<vmem>>, vector<1x8x1x3xf32>
    %103 = vector.shape_cast %102 : vector<1x8x1x3xf32> to vector<1x8x1x3xf32>
    %104 = vector.broadcast %103 : vector<1x8x1x3xf32> to vector<2x8x8x3xf32>
    %105 = arith.addf %101, %104 : vector<2x8x8x3xf32>
    %c0_9 = arith.constant 0 : index
    %c0_10 = arith.constant 0 : index
    %c0_11 = arith.constant 0 : index
    %c0_12 = arith.constant 0 : index
    %106 = vector.load %arg3[%c0_9, %c0_10, %c0_11, %c0_12] : memref<2x8x8x3xf32, #tpu.memory_space<vmem>>, vector<2x8x8x3xf32>
    tpu.vector_store %arg3[%c0_9, %c0_10, %c0_11, %c0_12], %105 {strides = array<i32>} : memref<2x8x8x3xf32, #tpu.memory_space<vmem>>, vector<2x8x8x3xf32>,
    return
  }
}

</mosaic_0001>

<llo_original>
// kernel: tpu_custom_call.1
$region0: #{tpu_custom_call.1}
  #allocation0 [shape = 'u32[]', space=smem, size = 0x4, offset = 0x4, fixed_abs, tag = 'smem constant byte address 0x4 - core index']
  #allocation1 [shape = 'u32[144,128]{1,0:T(1,128)}', space=vmem, size = 0x12000, scoped, tag = 'internal scratch']
  %s0 = inlined_call_operand.vmem [shape: f32[2,3,6,1], index: 0, kind: input, shape index: {}]
  %s1 = inlined_call_operand.vmem [shape: f32[24], index: 1, kind: input, shape index: {}]
  %s2 = inlined_call_operand.vmem [shape: f32[1,8,1,3], index: 2, kind: input, shape index: {}]
  %s3 = inlined_call_operand.vmem [shape: f32[2,8,8,3], index: 3, kind: output, shape index: {}]
  %s4 = sld [smem:[#allocation0]]
  $region26: #{tpu_custom_call.1} parent=0
    _
  %s6 = ssub.s32 1, %s4
  %s7 = scalar_select 0, %s6, %s4
  $region1: #{tpu_custom_call.1} parent=0
    #allocation2 [shape = 'u8[512]{0}', space=smem, size = 0x200, scoped, tag = 'input window, operand 1, single buffered']
    #allocation3 [shape = 's32[1]{0}', space=sflag, size = 0x4, scoped, tag = 'scoped memory for tpu_custom_call.1']
    %8 = vsyncpa [#allocation3], 0
    // Predicated region
    $region2: #{tpu_custom_call.1} parent=1 // pred_check
      _
    $region3: #{tpu_custom_call.1} parent=1 // pred_check_branch
      %10 = sbr.rel (0) target = $region5
    $region4: #{tpu_custom_call.1} parent=1 // pred_region
      _
    $region5: #{tpu_custom_call.1} parent=1 // pred_fallthru
      _
    // Predicated region
    $region6: #{tpu_custom_call.1} parent=1 // pred_check
      _
    $region7: #{tpu_custom_call.1} parent=1 // pred_check_branch
      %12 = sbr.rel (0) target = $region9
    $region8: #{tpu_custom_call.1} parent=1 // pred_region
      %s14 = ssub.s32 16, 16
      %15 = vsyncadd [#allocation3], %s14
      %s17 = sshll.u32 %s1, 4
      %s18 = int_to_ptr.vmem [resolvable:$true] %s17
      %20 = dma.vmem_to_smem %s18, 16, [#allocation2], [#allocation3]
    $region9: #{tpu_custom_call.1} parent=1 // pred_fallthru
      _
    // Predicated region
    $region10: #{tpu_custom_call.1} parent=1 // pred_check
      _
    $region11: #{tpu_custom_call.1} parent=1 // pred_check_branch
      %22 = sbr.rel (0) target = $region13
    $region12: #{tpu_custom_call.1} parent=1 // pred_region
      _
    $region13: #{tpu_custom_call.1} parent=1 // pred_fallthru
      _
    // Predicated region
    $region14: #{tpu_custom_call.1} parent=1 // pred_check
      _
    $region15: #{tpu_custom_call.1} parent=1 // pred_check_branch
      %24 = sbr.rel (0) target = $region17
    $region16: #{tpu_custom_call.1} parent=1 // pred_region
      %25 = dma.done [#allocation3], 16
    $region17: #{tpu_custom_call.1} parent=1 // pred_fallthru
      _
    %26 = sfence
    %v27 = vld [vmem:[%s0] sm:$0x3f]
    %v28 = vld [vmem:[%s0 + $0x8] sm:$0x3f]
    %v29 = vld [vmem:[%s0 + $0x10] sm:$0x3f]
    %v30 = vld [vmem:[%s0 + $0x18] sm:$0x3f]
    %v31 = vld [vmem:[%s0 + $0x20] sm:$0x3f]
    %v32 = vld [vmem:[%s0 + $0x28] sm:$0x3f]
    %34 = vset.pattern.permute.xlu0 0
    %35 = vperm.xlu0 %34, %v27
    %v36 = vpop.permute.xlu0 %35
    %38 = vset.pattern.permute.xlu0 0
    %39 = vperm.xlu0 %38, %v28
    %v40 = vpop.permute.xlu0 %39
    %42 = vset.pattern.permute.xlu0 0
    %43 = vperm.xlu0 %42, %v29
    %v44 = vpop.permute.xlu0 %43
    %46 = vset.pattern.permute.xlu0 0
    %47 = vperm.xlu0 %46, %v30
    %v48 = vpop.permute.xlu0 %47
    %50 = vset.pattern.permute.xlu0 0
    %51 = vperm.xlu0 %50, %v31
    %v52 = vpop.permute.xlu0 %51
    %54 = vset.pattern.permute.xlu0 0
    %55 = vperm.xlu0 %54, %v32
    %v56 = vpop.permute.xlu0 %55
    %v57 = vrot.slane %v36, 7
    %v58 = vrot.slane %v40, 7
    %v59 = vrot.slane %v44, 7
    %v60 = vrot.slane %v48, 7
    %v61 = vrot.slane %v52, 7
    %v62 = vrot.slane %v56, 7
    %vm69 = vcmask 1040384
    %v70 = vsel %vm69, 0.0, %v57
    %v71 = vsel %vm69, 0.0, %v58
    %v72 = vsel %vm69, 0.0, %v59
    %v73 = vsel %vm69, 0.0, %v60
    %v74 = vsel %vm69, 0.0, %v61
    %v75 = vsel %vm69, 0.0, %v62
    %vm76 = vcmask 1046528
    %v77 = vsel %vm76, %v70, 0.0
    %v78 = vsel %vm76, %v71, 0.0
    %v79 = vsel %vm76, %v72, 0.0
    %v80 = vsel %vm76, %v73, 0.0
    %v81 = vsel %vm76, %v74, 0.0
    %v82 = vsel %vm76, %v75, 0.0
    %v83 = vlaneseq
    %v84 = vand.u32 %v83, 127
    %vm85 = vcmp.eq.s32.totalorder %v84, 1
    %v86 = vsel %vm85, %v77, 0.0
    %v87 = vsel %vm85, %v78, 0.0
    %v88 = vsel %vm85, %v79, 0.0
    %v89 = vsel %vm85, %v80, 0.0
    %v90 = vsel %vm85, %v81, 0.0
    %v91 = vsel %vm85, %v82, 0.0
    %s92 = sld [smem:[#allocation2]]
    %v93 = vstv %s92
    %v94 = vmul.f32 %v93, %v86
    %v95 = vmul.f32 %v93, %v89
    %s96 = sld [smem:[#allocation2 + $0x1]]
    %v97 = vstv %s96
    %v98 = vmul.f32 %v97, %v87
    %v99 = vmul.f32 %v97, %v90
    %v100 = vadd.f32 %v94, %v98
    %v101 = vadd.f32 %v95, %v99
    %s102 = sld [smem:[#allocation2 + $0x2]]
    %v103 = vstv %s102
    %v104 = vmul.f32 %v103, %v88
    %v105 = vmul.f32 %v103, %v91
    %v106 = vadd.f32 %v100, %v104
    %v107 = vadd.f32 %v101, %v105
    %s108 = sld [smem:[#allocation2 + $0x3]]
    %v109 = vstv %s108
    %v110 = vmul.f32 %v109, %v86
    %v111 = vmul.f32 %v109, %v89
    %s112 = sld [smem:[#allocation2 + $0x4]]
    %v113 = vstv %s112
    %v114 = vmul.f32 %v113, %v87
    %v115 = vmul.f32 %v113, %v90
    %v116 = vadd.f32 %v110, %v114
    %v117 = vadd.f32 %v111, %v115
    %s118 = sld [smem:[#allocation2 + $0x5]]
    %v119 = vstv %s118
    %v120 = vmul.f32 %v119, %v88
    %v121 = vmul.f32 %v119, %v91
    %v122 = vadd.f32 %v116, %v120
    %v123 = vadd.f32 %v117, %v121
    %s124 = sld [smem:[#allocation2 + $0x6]]
    %v125 = vstv %s124
    %v126 = vmul.f32 %v125, %v86
    %v127 = vmul.f32 %v125, %v89
    %s128 = sld [smem:[#allocation2 + $0x7]]
    %v129 = vstv %s128
    %v130 = vmul.f32 %v129, %v87
    %v131 = vmul.f32 %v129, %v90
    %v132 = vadd.f32 %v126, %v130
    %v133 = vadd.f32 %v127, %v131
    %s134 = sld [smem:[#allocation2 + $0x8]]
    %v135 = vstv %s134
    %v136 = vmul.f32 %v135, %v88
    %v137 = vmul.f32 %v135, %v91
    %v138 = vadd.f32 %v132, %v136
    %v139 = vadd.f32 %v133, %v137
    %s140 = sld [smem:[#allocation2 + $0x9]]
    %v141 = vstv %s140
    %v142 = vmul.f32 %v141, %v86
    %v143 = vmul.f32 %v141, %v89
    %s144 = sld [smem:[#allocation2 + $0xa]]
    %v145 = vstv %s144
    %v146 = vmul.f32 %v145, %v87
    %v147 = vmul.f32 %v145, %v90
    %v148 = vadd.f32 %v142, %v146
    %v149 = vadd.f32 %v143, %v147
    %s150 = sld [smem:[#allocation2 + $0xb]]
    %v151 = vstv %s150
    %v152 = vmul.f32 %v151, %v88
    %v153 = vmul.f32 %v151, %v91
    %v154 = vadd.f32 %v148, %v152
    %v155 = vadd.f32 %v149, %v153
    %s156 = sld [smem:[#allocation2 + $0xc]]
    %v157 = vstv %s156
    %v158 = vmul.f32 %v157, %v86
    %v159 = vmul.f32 %v157, %v89
    %s160 = sld [smem:[#allocation2 + $0xd]]
    %v161 = vstv %s160
    %v162 = vmul.f32 %v161, %v87
    %v163 = vmul.f32 %v161, %v90
    %v164 = vadd.f32 %v158, %v162
    %v165 = vadd.f32 %v159, %v163
    %s166 = sld [smem:[#allocation2 + $0xe]]
    %v167 = vstv %s166
    %v168 = vmul.f32 %v167, %v88
    %v169 = vmul.f32 %v167, %v91
    %v170 = vadd.f32 %v164, %v168
    %v171 = vadd.f32 %v165, %v169
    %s172 = sld [smem:[#allocation2 + $0xf]]
    %v173 = vstv %s172
    %v174 = vmul.f32 %v173, %v86
    %v175 = vmul.f32 %v173, %v89
    %s176 = sld [smem:[#allocation2 + $0x10]]
    %v177 = vstv %s176
    %v178 = vmul.f32 %v177, %v87
    %v179 = vmul.f32 %v177, %v90
    %v180 = vadd.f32 %v174, %v178
    %v181 = vadd.f32 %v175, %v179
    %s182 = sld [smem:[#allocation2 + $0x11]]
    %v183 = vstv %s182
    %v184 = vmul.f32 %v183, %v88
    %v185 = vmul.f32 %v183, %v91
    %v186 = vadd.f32 %v180, %v184
    %v187 = vadd.f32 %v181, %v185
    %s188 = sld [smem:[#allocation2 + $0x12]]
    %v189 = vstv %s188
    %v190 = vmul.f32 %v189, %v86
    %v191 = vmul.f32 %v189, %v89
    %s192 = sld [smem:[#allocation2 + $0x13]]
    %v193 = vstv %s192
    %v194 = vmul.f32 %v193, %v87
    %v195 = vmul.f32 %v193, %v90
    %v196 = vadd.f32 %v190, %v194
    %v197 = vadd.f32 %v191, %v195
    %s198 = sld [smem:[#allocation2 + $0x14]]
    %v199 = vstv %s198
    %v200 = vmul.f32 %v199, %v88
    %v201 = vmul.f32 %v199, %v91
    %v202 = vadd.f32 %v196, %v200
    %v203 = vadd.f32 %v197, %v201
    %s204 = sld [smem:[#allocation2 + $0x15]]
    %v205 = vstv %s204
    %v206 = vmul.f32 %v205, %v86
    %v207 = vmul.f32 %v205, %v89
    %s208 = sld [smem:[#allocation2 + $0x16]]
    %v209 = vstv %s208
    %v210 = vmul.f32 %v209, %v87
    %v211 = vmul.f32 %v209, %v90
    %v212 = vadd.f32 %v206, %v210
    %v213 = vadd.f32 %v207, %v211
    %s214 = sld [smem:[#allocation2 + $0x17]]
    %v215 = vstv %s214
    %v216 = vmul.f32 %v215, %v88
    %v217 = vmul.f32 %v215, %v91
    %v218 = vadd.f32 %v212, %v216
    %v219 = vadd.f32 %v213, %v217
    %v220 = vld [vmem:[%s2] sm:$0x1]
    %v221 = vld [vmem:[%s2 + $0x1] sm:$0x1]
    %v222 = vld [vmem:[%s2 + $0x2] sm:$0x1]
    %v223 = vld [vmem:[%s2 + $0x3] sm:$0x1]
    %v224 = vld [vmem:[%s2 + $0x4] sm:$0x1]
    %v225 = vld [vmem:[%s2 + $0x5] sm:$0x1]
    %v226 = vld [vmem:[%s2 + $0x6] sm:$0x1]
    %v227 = vld [vmem:[%s2 + $0x7] sm:$0x1]
    %v236 = vlaneseq
    %v237 = vshrl.u32 %v236, 7
    %v238 = vsub.s32 0, %v237
    %v239 = vrot.slane %v220, %v238
    %v240 = vlaneseq
    %v241 = vshrl.u32 %v240, 7
    %v242 = vsub.s32 0, %v241
    %v243 = vrot.slane %v221, %v242
    %v244 = vlaneseq
    %v245 = vshrl.u32 %v244, 7
    %v246 = vsub.s32 0, %v245
    %v247 = vrot.slane %v222, %v246
    %v248 = vlaneseq
    %v249 = vshrl.u32 %v248, 7
    %v250 = vsub.s32 0, %v249
    %v251 = vrot.slane %v223, %v250
    %v252 = vlaneseq
    %v253 = vshrl.u32 %v252, 7
    %v254 = vsub.s32 0, %v253
    %v255 = vrot.slane %v224, %v254
    %v256 = vlaneseq
    %v257 = vshrl.u32 %v256, 7
    %v258 = vsub.s32 0, %v257
    %v259 = vrot.slane %v225, %v258
    %v260 = vlaneseq
    %v261 = vshrl.u32 %v260, 7
    %v262 = vsub.s32 0, %v261
    %v263 = vrot.slane %v226, %v262
    %v264 = vlaneseq
    %v265 = vshrl.u32 %v264, 7
    %v266 = vsub.s32 0, %v265
    %v267 = vrot.slane %v227, %v266
    %v276 = vadd.f32 %v106, %v239
    %v277 = vadd.f32 %v122, %v243
    %v278 = vadd.f32 %v138, %v247
    %v279 = vadd.f32 %v154, %v251
    %v280 = vadd.f32 %v170, %v255
    %v281 = vadd.f32 %v186, %v259
    %v282 = vadd.f32 %v202, %v263
    %v283 = vadd.f32 %v218, %v267
    %v284 = vadd.f32 %v107, %v239
    %v285 = vadd.f32 %v123, %v243
    %v286 = vadd.f32 %v139, %v247
    %v287 = vadd.f32 %v155, %v251
    %v288 = vadd.f32 %v171, %v255
    %v289 = vadd.f32 %v187, %v259
    %v290 = vadd.f32 %v203, %v263
    %v291 = vadd.f32 %v219, %v267
    %vm292 = vcmask 23552
    %293 = vst.msk [vmem:[%s3] sm:$0xff] %vm292, %v276
    %294 = vst.msk [vmem:[%s3 + $0x8] sm:$0xff] %vm292, %v277
    %295 = vst.msk [vmem:[%s3 + $0x10] sm:$0xff] %vm292, %v278
    %296 = vst.msk [vmem:[%s3 + $0x18] sm:$0xff] %vm292, %v279
    %297 = vst.msk [vmem:[%s3 + $0x20] sm:$0xff] %vm292, %v280
    %298 = vst.msk [vmem:[%s3 + $0x28] sm:$0xff] %vm292, %v281
    %299 = vst.msk [vmem:[%s3 + $0x30] sm:$0xff] %vm292, %v282
    %300 = vst.msk [vmem:[%s3 + $0x38] sm:$0xff] %vm292, %v283
    %301 = vst.msk [vmem:[%s3 + $0x40] sm:$0xff] %vm292, %v284
    %302 = vst.msk [vmem:[%s3 + $0x48] sm:$0xff] %vm292, %v285
    %303 = vst.msk [vmem:[%s3 + $0x50] sm:$0xff] %vm292, %v286
    %304 = vst.msk [vmem:[%s3 + $0x58] sm:$0xff] %vm292, %v287
    %305 = vst.msk [vmem:[%s3 + $0x60] sm:$0xff] %vm292, %v288
    %306 = vst.msk [vmem:[%s3 + $0x68] sm:$0xff] %vm292, %v289
    %307 = vst.msk [vmem:[%s3 + $0x70] sm:$0xff] %vm292, %v290
    %308 = vst.msk [vmem:[%s3 + $0x78] sm:$0xff] %vm292, %v291
    // Predicated region
    $region18: #{tpu_custom_call.1} parent=1 // pred_check
      _
    $region19: #{tpu_custom_call.1} parent=1 // pred_check_branch
      %310 = sbr.rel (0) target = $region21
    $region20: #{tpu_custom_call.1} parent=1 // pred_region
      _
    $region21: #{tpu_custom_call.1} parent=1 // pred_fallthru
      _
    // Predicated region
    $region22: #{tpu_custom_call.1} parent=1 // pred_check
      _
    $region23: #{tpu_custom_call.1} parent=1 // pred_check_branch
      %312 = sbr.rel (0) target = $region25
    $region24: #{tpu_custom_call.1} parent=1 // pred_region
      _
    $region25: #{tpu_custom_call.1} parent=1 // pred_fallthru
      _
    %313 = vsyncpa [#allocation3], 1

</llo_original>
